<compile_context>
chip_gen: v7x
topology: tpu7x:2x2x1
jax: 0.10.0
libtpu: 0.0.40
codegen_flags: <defaults>
</compile_context>

<pallas_src>
import math

import jax
import jax.numpy as jnp
import numpy as np
from jax.experimental import pallas as pl
from jax.experimental.pallas import tpu as pltpu

S, D_IN, D_OUT = 3, 3, 5        # logical sizes: seq, in-features, out-features
DP = 128                        # lane width per fused projection slice


def _attn_kernel(x_ref, w_ref, o_ref):
    x = x_ref[...]                                  # (3, 3)
    w = w_ref[...]                                  # (4, 384) = [wq*s|wk|wv ; bq*s|bk|bv]

    # Fused q/k/v projection with the bias folded into the last weight row.
    # D_IN == 3, so a 3-term broadcast multiply-add on the VPU beats pushing a
    # K=3 contraction through the MXU (and avoids any padded-K concerns).
    qkv = (x[:, 0:1] * w[0:1, :]
           + x[:, 1:2] * w[1:2, :]
           + x[:, 2:3] * w[2:3, :]
           + w[3:4, :])                             # (3, 384)

    q = qkv[:, 0 * DP:1 * DP]                       # (3, 128), scale pre-folded
    k = qkv[:, 1 * DP:2 * DP]                       # (3, 128)
    v = qkv[:, 2 * DP:2 * DP + D_OUT]               # (3, 5)   lane-tile-aligned slice

    # q @ k^T : contraction over the 128-lane feature axis (tile aligned).
    qk = jax.lax.dot_general(
        q, k, (((1,), (1,)), ((), ())), preferred_element_type=jnp.float32
    )                                               # (3, 3)

    # Row softmax over the 3 (all valid) key positions. Exact divide: the EUP
    # is idle here and it keeps bit-accuracy vs. the reference.
    m = jnp.max(qk, axis=-1, keepdims=True)
    e = jnp.exp(qk - m)
    p = e / jnp.sum(e, axis=-1, keepdims=True)      # (3, 3)

    # Lower-triangular (causal) mask applied AFTER the softmax, as in the spec.
    rows = jax.lax.broadcasted_iota(jnp.int32, (S, S), 0)
    cols = jax.lax.broadcasted_iota(jnp.int32, (S, S), 1)
    v4 = jnp.where(rows >= cols, p, jnp.float32(0.0))

    # (softmax * tril) @ v, again as a 3-term broadcast sum (K = 3).
    o_ref[...] = (v4[:, 0:1] * v[0:1, :]
                  + v4[:, 1:2] * v[1:2, :]
                  + v4[:, 2:3] * v[2:3, :])         # (3, 5)


def build_fused_params(wq, bq, wk, bk, wv, bv):
    """Pad + fuse the three linear layers once, outside the per-call path.

    w*: (D_IN, D_OUT), b*: (D_OUT,).  Returns W of shape (D_IN + 1, 3*DP):
    rows 0..D_IN-1 hold [wq*scale | wk | wv] in lane-aligned 128-wide slices,
    the last row holds the (scaled) biases.  The 1/sqrt(D_OUT) attention scale
    is folded into the query projection.
    """
    scale = np.float32(1.0 / math.sqrt(D_OUT))
    W = np.zeros((D_IN + 1, 3 * DP), np.float32)
    W[:D_IN, 0 * DP:0 * DP + D_OUT] = np.asarray(wq, np.float32) * scale
    W[D_IN,  0 * DP:0 * DP + D_OUT] = np.asarray(bq, np.float32) * scale
    W[:D_IN, 1 * DP:1 * DP + D_OUT] = np.asarray(wk, np.float32)
    W[D_IN,  1 * DP:1 * DP + D_OUT] = np.asarray(bk, np.float32)
    W[:D_IN, 2 * DP:2 * DP + D_OUT] = np.asarray(wv, np.float32)
    W[D_IN,  2 * DP:2 * DP + D_OUT] = np.asarray(bv, np.float32)
    return jnp.asarray(W)


@jax.jit
def attention_forward(x, w_fused):
    """x: (S, D_IN) f32; w_fused: (D_IN+1, 3*DP) f32 -> (S, D_OUT) f32."""
    vmem = pl.BlockSpec(memory_space=pltpu.MemorySpace.VMEM)
    return pl.pallas_call(
        _attn_kernel,
        out_shape=jax.ShapeDtypeStruct((S, D_OUT), jnp.float32),
        in_specs=[vmem, vmem],
        out_specs=vmem,
    )(x, w_fused)


def _reference(x, wq, bq, wk, bk, wv, bv):
    q = x @ wq + bq
    k = x @ wk + bk
    v = x @ wv + bv
    qk = (q @ k.T) / math.sqrt(D_OUT)
    p = jax.nn.softmax(qk, axis=-1)
    mask = jnp.tril(jnp.ones((S, S), jnp.float32))
    return (p * mask) @ v


if __name__ == "__main__":
    key = jax.random.PRNGKey(0)
    kx, kq, kk, kv, kbq, kbk, kbv = jax.random.split(key, 7)

    # Deterministic init (matches nn.Linear's U(-1/sqrt(in), 1/sqrt(in))).
    bound = 1.0 / math.sqrt(D_IN)
    x = jax.random.normal(kx, (S, D_IN), jnp.float32)
    wq = jax.random.uniform(kq, (D_IN, D_OUT), jnp.float32, -bound, bound)
    wk = jax.random.uniform(kk, (D_IN, D_OUT), jnp.float32, -bound, bound)
    wv = jax.random.uniform(kv, (D_IN, D_OUT), jnp.float32, -bound, bound)
    bq = jax.random.uniform(kbq, (D_OUT,), jnp.float32, -bound, bound)
    bk = jax.random.uniform(kbk, (D_OUT,), jnp.float32, -bound, bound)
    bv = jax.random.uniform(kbv, (D_OUT,), jnp.float32, -bound, bound)

    # One-time fused/padded parameter build (not part of the per-call graph).
    w_fused = build_fused_params(wq, bq, wk, bk, wv, bv)

    out = attention_forward(x, w_fused)
    jax.block_until_ready(out)

    ref = _reference(x, wq, bq, wk, bk, wv, bv)
    np.testing.assert_allclose(np.asarray(out), np.asarray(ref),
                               rtol=1e-4, atol=1e-5)

    print("KERNEL_OK")
</pallas_src>

<mosaic_0001>
module attributes {stable_mosaic.version = 11 : i64} {
  func.func @_attn_kernel(%arg0: memref<3x3xf32, #tpu.memory_space<vmem>>, %arg1: memref<4x384xf32, #tpu.memory_space<vmem>>, %arg2: memref<3x5xf32, #tpu.memory_space<vmem>>) attributes {dimension_semantics = [], scalar_prefetch = 0 : i64, scratch_operands = 0 : i64, tpu.core_type = #tpu.core_type<tc>} {
    %c0 = arith.constant 0 : index
    %c0_0 = arith.constant 0 : index
    %0 = vector.load %arg0[%c0, %c0_0] : memref<3x3xf32, #tpu.memory_space<vmem>>, vector<3x3xf32>
    %c0_1 = arith.constant 0 : index
    %c0_2 = arith.constant 0 : index
    %1 = vector.load %arg1[%c0_1, %c0_2] : memref<4x384xf32, #tpu.memory_space<vmem>>, vector<4x384xf32>
    %2 = vector.extract_strided_slice %0 {offsets = [0, 0], sizes = [3, 1], strides = [1, 1]} : vector<3x3xf32> to vector<3x1xf32>
    %3 = vector.extract_strided_slice %1 {offsets = [0, 0], sizes = [1, 384], strides = [1, 1]} : vector<4x384xf32> to vector<1x384xf32>
    %4 = vector.broadcast %2 : vector<3x1xf32> to vector<3x384xf32>
    %5 = vector.broadcast %3 : vector<1x384xf32> to vector<3x384xf32>
    %6 = arith.mulf %4, %5 : vector<3x384xf32>
    %7 = vector.extract_strided_slice %0 {offsets = [0, 1], sizes = [3, 1], strides = [1, 1]} : vector<3x3xf32> to vector<3x1xf32>
    %8 = vector.extract_strided_slice %1 {offsets = [1, 0], sizes = [1, 384], strides = [1, 1]} : vector<4x384xf32> to vector<1x384xf32>
    %9 = vector.broadcast %7 : vector<3x1xf32> to vector<3x384xf32>
    %10 = vector.broadcast %8 : vector<1x384xf32> to vector<3x384xf32>
    %11 = arith.mulf %9, %10 : vector<3x384xf32>
    %12 = arith.addf %6, %11 : vector<3x384xf32>
    %13 = vector.extract_strided_slice %0 {offsets = [0, 2], sizes = [3, 1], strides = [1, 1]} : vector<3x3xf32> to vector<3x1xf32>
    %14 = vector.extract_strided_slice %1 {offsets = [2, 0], sizes = [1, 384], strides = [1, 1]} : vector<4x384xf32> to vector<1x384xf32>
    %15 = vector.broadcast %13 : vector<3x1xf32> to vector<3x384xf32>
    %16 = vector.broadcast %14 : vector<1x384xf32> to vector<3x384xf32>
    %17 = arith.mulf %15, %16 : vector<3x384xf32>
    %18 = arith.addf %12, %17 : vector<3x384xf32>
    %19 = vector.extract_strided_slice %1 {offsets = [3, 0], sizes = [1, 384], strides = [1, 1]} : vector<4x384xf32> to vector<1x384xf32>
    %20 = vector.broadcast %19 : vector<1x384xf32> to vector<3x384xf32>
    %21 = arith.addf %18, %20 : vector<3x384xf32>
    %22 = vector.extract_strided_slice %21 {offsets = [0, 0], sizes = [3, 128], strides = [1, 1]} : vector<3x384xf32> to vector<3x128xf32>
    %23 = vector.extract_strided_slice %21 {offsets = [0, 128], sizes = [3, 128], strides = [1, 1]} : vector<3x384xf32> to vector<3x128xf32>
    %24 = vector.extract_strided_slice %21 {offsets = [0, 256], sizes = [3, 5], strides = [1, 1]} : vector<3x384xf32> to vector<3x5xf32>
    %cst = arith.constant dense<0.000000e+00> : vector<3x3xf32>
    %25 = tpu.matmul %22, %23, %cst {dimension_numbers = #tpu.dot_dimension_numbers<[1], [1], [0], [0], [0, 0, 1, 0], [], []>} : vector<3x128xf32>, vector<3x128xf32>, vector<3x3xf32> -> vector<3x3xf32>
    %cst_3 = arith.constant dense<0xFF800000> : vector<3xf32>
    %26 = vector.multi_reduction <maximumf>, %25, %cst_3 [1] : vector<3x3xf32> to vector<3xf32>
    %27 = vector.shape_cast %26 : vector<3xf32> to vector<3x1xf32>
    %28 = vector.broadcast %27 : vector<3x1xf32> to vector<3x3xf32>
    %29 = arith.subf %25, %28 : vector<3x3xf32>
    %30 = math.exp %29 : vector<3x3xf32>
    %cst_4 = arith.constant dense<0.000000e+00> : vector<3xf32>
    %31 = vector.multi_reduction <add>, %30, %cst_4 [1] : vector<3x3xf32> to vector<3xf32>
    %32 = vector.shape_cast %31 : vector<3xf32> to vector<3x1xf32>
    %33 = vector.broadcast %32 : vector<3x1xf32> to vector<3x3xf32>
    %34 = arith.divf %30, %33 : vector<3x3xf32>
    %35 = tpu.iota {dimensions = array<i32: 0>} : vector<3x3xi32>
    %36 = tpu.iota {dimensions = array<i32: 1>} : vector<3x3xi32>
    %37 = arith.cmpi sge, %35, %36 : vector<3x3xi32>
    %cst_5 = arith.constant 0.000000e+00 : f32
    %38 = vector.broadcast %cst_5 : f32 to vector<3x3xf32>
    %39 = arith.select %37, %34, %38 : vector<3x3xi1>, vector<3x3xf32>
    %40 = vector.extract_strided_slice %39 {offsets = [0, 0], sizes = [3, 1], strides = [1, 1]} : vector<3x3xf32> to vector<3x1xf32>
    %41 = vector.extract_strided_slice %24 {offsets = [0, 0], sizes = [1, 5], strides = [1, 1]} : vector<3x5xf32> to vector<1x5xf32>
    %42 = vector.broadcast %40 : vector<3x1xf32> to vector<3x5xf32>
    %43 = vector.broadcast %41 : vector<1x5xf32> to vector<3x5xf32>
    %44 = arith.mulf %42, %43 : vector<3x5xf32>
    %45 = vector.extract_strided_slice %39 {offsets = [0, 1], sizes = [3, 1], strides = [1, 1]} : vector<3x3xf32> to vector<3x1xf32>
    %46 = vector.extract_strided_slice %24 {offsets = [1, 0], sizes = [1, 5], strides = [1, 1]} : vector<3x5xf32> to vector<1x5xf32>
    %47 = vector.broadcast %45 : vector<3x1xf32> to vector<3x5xf32>
    %48 = vector.broadcast %46 : vector<1x5xf32> to vector<3x5xf32>
    %49 = arith.mulf %47, %48 : vector<3x5xf32>
    %50 = arith.addf %44, %49 : vector<3x5xf32>
    %51 = vector.extract_strided_slice %39 {offsets = [0, 2], sizes = [3, 1], strides = [1, 1]} : vector<3x3xf32> to vector<3x1xf32>
    %52 = vector.extract_strided_slice %24 {offsets = [2, 0], sizes = [1, 5], strides = [1, 1]} : vector<3x5xf32> to vector<1x5xf32>
    %53 = vector.broadcast %51 : vector<3x1xf32> to vector<3x5xf32>
    %54 = vector.broadcast %52 : vector<1x5xf32> to vector<3x5xf32>
    %55 = arith.mulf %53, %54 : vector<3x5xf32>
    %56 = arith.addf %50, %55 : vector<3x5xf32>
    %c0_6 = arith.constant 0 : index
    %c0_7 = arith.constant 0 : index
    %57 = vector.load %arg2[%c0_6, %c0_7] : memref<3x5xf32, #tpu.memory_space<vmem>>, vector<3x5xf32>
    tpu.vector_store %arg2[%c0_6, %c0_7], %56 {strides = array<i32>} : memref<3x5xf32, #tpu.memory_space<vmem>>, vector<3x5xf32>,
    return
  }
}

</mosaic_0001>

<llo_original>
// kernel: attention_forward.1
$region0: #{attention_forward.1}
  #allocation0 [shape = 'u32[]', space=smem, size = 0x4, offset = 0x4, fixed_abs, tag = 'smem constant byte address 0x4 - core index']
  #allocation1 [shape = 'u32[144,128]{1,0:T(1,128)}', space=vmem, size = 0x12000, scoped, tag = 'internal scratch']
  %s0 = inlined_call_operand.hbm [shape: f32[3,3], index: 0, kind: input, shape index: {}]
  %s1 = inlined_call_operand.hbm [shape: f32[4,384], index: 1, kind: input, shape index: {}]
  %s2 = inlined_call_operand.hbm [shape: f32[3,5], index: 2, kind: output, shape index: {}]
  %s3 = sld [smem:[#allocation0]]
  $region26: #{attention_forward.1} parent=0
    _
  %s5 = ssub.s32 1, %s3
  %s6 = scalar_select 0, %s5, %s3
  $region1: #{attention_forward.1} parent=0
    #allocation2 [shape = 'u8[2048]{0}', space=vmem, size = 0x800, scoped, tag = 'input window, operand 0, single buffered']
    #allocation3 [shape = 's32[1]{0}', space=sflag, size = 0x4, scoped, tag = 'scoped memory for attention_forward.1']
    #allocation4 [shape = 's32[1]{0}', space=sflag, size = 0x4, scoped, tag = 'scoped memory for attention_forward.1']
    #allocation5 [shape = 'u8[6144]{0}', space=vmem, size = 0x1800, scoped, tag = 'input window, operand 1, single buffered']
    #allocation6 [shape = 's32[1]{0}', space=sflag, size = 0x4, scoped, tag = 'scoped memory for attention_forward.1']
    #allocation7 [shape = 'u8[2048]{0}', space=vmem, size = 0x800, scoped, tag = 'output window, operand 0, single buffered']
    %7 = vsyncpa [#allocation3], 0
    %8 = vsyncpa [#allocation6], 0
    %9 = vsyncpa [#allocation4], 0
    // Predicated region
    $region2: #{attention_forward.1} parent=1 // pred_check
      _
    $region3: #{attention_forward.1} parent=1 // pred_check_branch
      %11 = sbr.rel (0) target = $region5
    $region4: #{attention_forward.1} parent=1 // pred_region
      %s13 = ssub.s32 64, 64
      %14 = vsyncadd [#allocation3], %s13
      %s16 = sshll.u32 [#allocation2], 4
      %s17 = int_to_ptr.vmem [resolvable:$true] %s16
      %19 = dma.hbm_to_vmem [thread:$0]  %s0, 64, %s17, [#allocation3]
    $region5: #{attention_forward.1} parent=1 // pred_fallthru
      _
    // Predicated region
    $region6: #{attention_forward.1} parent=1 // pred_check
      _
    $region7: #{attention_forward.1} parent=1 // pred_check_branch
      %21 = sbr.rel (0) target = $region9
    $region8: #{attention_forward.1} parent=1 // pred_region
      %s23 = ssub.s32 192, 192
      %24 = vsyncadd [#allocation6], %s23
      %s26 = sshll.u32 [#allocation5], 4
      %s27 = int_to_ptr.vmem [resolvable:$true] %s26
      %29 = dma.hbm_to_vmem [thread:$0]  %s1, 192, %s27, [#allocation6]
    $region9: #{attention_forward.1} parent=1 // pred_fallthru
      _
    // Predicated region
    $region10: #{attention_forward.1} parent=1 // pred_check
      _
    $region11: #{attention_forward.1} parent=1 // pred_check_branch
      %31 = sbr.rel (0) target = $region13
    $region12: #{attention_forward.1} parent=1 // pred_region
      %32 = dma.done [#allocation3], 64
    $region13: #{attention_forward.1} parent=1 // pred_fallthru
      _
    // Predicated region
    $region14: #{attention_forward.1} parent=1 // pred_check
      _
    $region15: #{attention_forward.1} parent=1 // pred_check_branch
      %34 = sbr.rel (0) target = $region17
    $region16: #{attention_forward.1} parent=1 // pred_region
      %35 = dma.done [#allocation6], 192
    $region17: #{attention_forward.1} parent=1 // pred_fallthru
      _
    %v36 = vld [vmem:[#allocation2] sm:$0x7]
    %v37 = vld [vmem:[#allocation5] sm:$0xff]
    %v38 = vld [vmem:[#allocation5 + $0x8] sm:$0xf]
    %40 = vset.pattern.permute.xlu0 0
    %41 = vperm.xlu0 %40, %v36
    %v42 = vpop.permute.xlu0 %41
    %v46 = vlaneseq
    %v47 = vshrl.u32 %v46, 7
    %v48 = vsub.s32 0, %v47
    %v49 = vrot.slane %v37, %v48
    %v50 = vlaneseq
    %v51 = vshrl.u32 %v50, 7
    %v52 = vsub.s32 4, %v51
    %v53 = vrot.slane %v37, %v52
    %v54 = vlaneseq
    %v55 = vshrl.u32 %v54, 7
    %v56 = vsub.s32 0, %v55
    %v57 = vrot.slane %v38, %v56
    %v61 = vlaneseq
    %v62 = vshrl.u32 %v61, 7
    %v63 = vsub.s32 0, %v62
    %v64 = vrot.slane %v49, %v63
    %v65 = vlaneseq
    %v66 = vshrl.u32 %v65, 7
    %v67 = vsub.s32 0, %v66
    %v68 = vrot.slane %v53, %v67
    %v69 = vlaneseq
    %v70 = vshrl.u32 %v69, 7
    %v71 = vsub.s32 0, %v70
    %v72 = vrot.slane %v57, %v71
    %v73 = vmul.f32 %v42, %v64
    %v74 = vmul.f32 %v42, %v68
    %v75 = vmul.f32 %v42, %v72
    %76 = vset.pattern.permute.xlu0 1
    %77 = vperm.xlu0 %76, %v36
    %v78 = vpop.permute.xlu0 %77
    %v80 = vlaneseq
    %v81 = vshrl.u32 %v80, 7
    %v82 = vsub.s32 1, %v81
    %v83 = vrot.slane %v37, %v82
    %v84 = vlaneseq
    %v85 = vshrl.u32 %v84, 7
    %v86 = vsub.s32 5, %v85
    %v87 = vrot.slane %v37, %v86
    %v88 = vlaneseq
    %v89 = vshrl.u32 %v88, 7
    %v90 = vsub.s32 1, %v89
    %v91 = vrot.slane %v38, %v90
    %v95 = vlaneseq
    %v96 = vshrl.u32 %v95, 7
    %v97 = vsub.s32 1, %v96
    %v98 = vrot.slane %v83, %v97
    %v99 = vlaneseq
    %v100 = vshrl.u32 %v99, 7
    %v101 = vsub.s32 1, %v100
    %v102 = vrot.slane %v87, %v101
    %v103 = vlaneseq
    %v104 = vshrl.u32 %v103, 7
    %v105 = vsub.s32 1, %v104
    %v106 = vrot.slane %v91, %v105
    %v107 = vmul.f32 %v78, %v98
    %v108 = vmul.f32 %v78, %v102
    %v109 = vmul.f32 %v78, %v106
    %v110 = vadd.f32 %v73, %v107
    %v111 = vadd.f32 %v74, %v108
    %v112 = vadd.f32 %v75, %v109
    %113 = vset.pattern.permute.xlu0 2
    %114 = vperm.xlu0 %113, %v36
    %v115 = vpop.permute.xlu0 %114
    %v117 = vlaneseq
    %v118 = vshrl.u32 %v117, 7
    %v119 = vsub.s32 2, %v118
    %v120 = vrot.slane %v37, %v119
    %v121 = vlaneseq
    %v122 = vshrl.u32 %v121, 7
    %v123 = vsub.s32 6, %v122
    %v124 = vrot.slane %v37, %v123
    %v125 = vlaneseq
    %v126 = vshrl.u32 %v125, 7
    %v127 = vsub.s32 2, %v126
    %v128 = vrot.slane %v38, %v127
    %v132 = vlaneseq
    %v133 = vshrl.u32 %v132, 7
    %v134 = vsub.s32 2, %v133
    %v135 = vrot.slane %v120, %v134
    %v136 = vlaneseq
    %v137 = vshrl.u32 %v136, 7
    %v138 = vsub.s32 2, %v137
    %v139 = vrot.slane %v124, %v138
    %v140 = vlaneseq
    %v141 = vshrl.u32 %v140, 7
    %v142 = vsub.s32 2, %v141
    %v143 = vrot.slane %v128, %v142
    %v144 = vmul.f32 %v115, %v135
    %v145 = vmul.f32 %v115, %v139
    %v146 = vmul.f32 %v115, %v143
    %v147 = vadd.f32 %v110, %v144
    %v148 = vadd.f32 %v111, %v145
    %v149 = vadd.f32 %v112, %v146
    %v150 = vlaneseq
    %v151 = vshrl.u32 %v150, 7
    %v152 = vsub.s32 3, %v151
    %v153 = vrot.slane %v37, %v152
    %v154 = vlaneseq
    %v155 = vshrl.u32 %v154, 7
    %v156 = vsub.s32 7, %v155
    %v157 = vrot.slane %v37, %v156
    %v158 = vlaneseq
    %v159 = vshrl.u32 %v158, 7
    %v160 = vsub.s32 3, %v159
    %v161 = vrot.slane %v38, %v160
    %v165 = vlaneseq
    %v166 = vshrl.u32 %v165, 7
    %v167 = vsub.s32 3, %v166
    %v168 = vrot.slane %v153, %v167
    %v169 = vlaneseq
    %v170 = vshrl.u32 %v169, 7
    %v171 = vsub.s32 3, %v170
    %v172 = vrot.slane %v157, %v171
    %v173 = vlaneseq
    %v174 = vshrl.u32 %v173, 7
    %v175 = vsub.s32 3, %v174
    %v176 = vrot.slane %v161, %v175
    %v177 = vadd.f32 %v147, %v168
    %v178 = vadd.f32 %v148, %v172
    %v179 = vadd.f32 %v149, %v176
    %180 = vmatprep.subr.mxu0 0.0
    %181 = vmatpush1.xpose.msra.mxu0 %v178
    %182 = vmatprep.subr.mxu0 0.0
    %183 = vmatpush1.xpose.msra.mxu0 0.0
    %184 = vmatprep.subr.mxu0 0.0
    %185 = vmatpush1.xpose.msra.mxu0 0.0
    %186 = vmatprep.subr.mxu0 0.0
    %187 = vmatpush1.xpose.msra.mxu0 0.0
    %188 = vmatprep.subr.mxu0 0.0
    %189 = vmatpush1.xpose.msra.mxu0 0.0
    %190 = vmatprep.subr.mxu0 0.0
    %191 = vmatpush1.xpose.msra.mxu0 0.0
    %192 = vmatprep.subr.mxu0 0.0
    %193 = vmatpush1.xpose.msra.mxu0 0.0
    %194 = vmatprep.subr.mxu0 0.0
    %195 = vmatpush1.xpose.msra.mxu0 0.0
    %196 = vmatprep.subr.mxu0 0.0
    %197 = vmatpush1.xpose.msra.mxu0 0.0
    %198 = vmatprep.subr.mxu0 0.0
    %199 = vmatpush1.xpose.msra.mxu0 0.0
    %200 = vmatprep.subr.mxu0 0.0
    %201 = vmatpush1.xpose.msra.mxu0 0.0
    %202 = vmatprep.subr.mxu0 0.0
    %203 = vmatpush1.xpose.msra.mxu0 0.0
    %204 = vmatprep.subr.mxu0 0.0
    %205 = vmatpush1.xpose.msra.mxu0 0.0
    %206 = vmatprep.subr.mxu0 0.0
    %207 = vmatpush1.xpose.msra.mxu0 0.0
    %208 = vmatprep.subr.mxu0 0.0
    %209 = vmatpush1.xpose.msra.mxu0 0.0
    %210 = vmatprep.subr.mxu0 0.0
    %211 = vmatpush1.xpose.msra.mxu0 0.0
    %212 = vmatprep.subr.mxu0 0.0
    %213 = vmatpush1.xpose.msra.mxu0 0.0
    %214 = vmatprep.subr.mxu0 0.0
    %215 = vmatpush1.xpose.msra.mxu0 0.0
    %216 = vmatprep.subr.mxu0 0.0
    %217 = vmatpush1.xpose.msra.mxu0 0.0
    %218 = vmatprep.subr.mxu0 0.0
    %219 = vmatpush1.xpose.msra.mxu0 0.0
    %220 = vmatprep.subr.mxu0 0.0
    %221 = vmatpush1.xpose.msra.mxu0 0.0
    %222 = vmatprep.subr.mxu0 0.0
    %223 = vmatpush1.xpose.msra.mxu0 0.0
    %224 = vmatprep.subr.mxu0 0.0
    %225 = vmatpush1.xpose.msra.mxu0 0.0
    %226 = vmatprep.subr.mxu0 0.0
    %227 = vmatpush1.xpose.msra.mxu0 0.0
    %228 = vmatprep.subr.mxu0 0.0
    %229 = vmatpush1.xpose.msra.mxu0 0.0
    %230 = vmatprep.subr.mxu0 0.0
    %231 = vmatpush1.xpose.msra.mxu0 0.0
    %232 = vmatprep.subr.mxu0 0.0
    %233 = vmatpush1.xpose.msra.mxu0 0.0
    %234 = vmatprep.subr.mxu0 0.0
    %235 = vmatpush1.xpose.msra.mxu0 0.0
    %236 = vmatprep.subr.mxu0 0.0
    %237 = vmatpush1.xpose.msra.mxu0 0.0
    %238 = vmatprep.subr.mxu0 0.0
    %239 = vmatpush1.xpose.msra.mxu0 0.0
    %240 = vmatprep.subr.mxu0 0.0
    %241 = vmatpush1.xpose.msra.mxu0 0.0
    %242 = vmatprep.subr.mxu0 0.0
    %243 = vmatpush1.xpose.msra.mxu0 0.0
    %244 = vmatprep.mubr.f32.mxu0 0.0
    %245 = vmatmul.mubr.f32.gmra.mrb[0].mxu0 %v177
    %v246 = vpop.f32.mrb[0].mxu0
    %v247 = vadd.f32 0.0, %v246
    %v248 = vpop.f32.mrb[0].mxu0
    %249 = vdwg.mxu0
    %vm250 = vcmask 18432
    %v251 = vsel %vm250, %v247, -inf
    %252 = vmax.xlane.f32.xlu0 %v251
    %v253 = vpop.xlane.xlu0 %252
    %v254 = vsub.f32 %v247, %v253
    %v255 = vmul.f32 %v254, 1.442695
    %v256 = vpow.pop %v255
    %v257 = vsel %vm250, %v256, 0.0
    %258 = vadd.xlane.f32.xlu0 %v257
    %v259 = vpop.xlane.xlu0 %258
    %v260 = vrcp.pop %v259
    %v261 = vmul.f32 %v256, %v260
    %v262 = vlaneseq
    %v263 = vshrl.u32 %v262, 7
    %v264 = vlaneseq
    %v265 = vand.u32 %v264, 127
    %vm266 = vcmp.ge.s32.totalorder %v263, %v265
    %v267 = vsel %vm266, %v261, 0.0
    %269 = vset.pattern.permute.xlu0 0
    %270 = vperm.xlu0 %269, %v267
    %v271 = vpop.permute.xlu0 %270
    %v273 = vlaneseq
    %v274 = vshrl.u32 %v273, 7
    %v275 = vsub.s32 0, %v274
    %v276 = vrot.slane %v179, %v275
    %v277 = vmul.f32 %v271, %v276
    %278 = vset.pattern.permute.xlu0 1
    %279 = vperm.xlu0 %278, %v267
    %v280 = vpop.permute.xlu0 %279
    %v282 = vlaneseq
    %v283 = vshrl.u32 %v282, 7
    %v284 = vsub.s32 1, %v283
    %v285 = vrot.slane %v179, %v284
    %v286 = vmul.f32 %v280, %v285
    %v287 = vadd.f32 %v277, %v286
    %288 = vset.pattern.permute.xlu0 2
    %289 = vperm.xlu0 %288, %v267
    %v290 = vpop.permute.xlu0 %289
    %v292 = vlaneseq
    %v293 = vshrl.u32 %v292, 7
    %v294 = vsub.s32 2, %v293
    %v295 = vrot.slane %v179, %v294
    %v296 = vmul.f32 %v290, %v295
    %v297 = vadd.f32 %v287, %v296
    %vm298 = vcmask 34816
    %299 = vst.msk [vmem:[#allocation7] sm:$0x7] %vm298, %v297
    // Predicated region
    $region18: #{attention_forward.1} parent=1 // pred_check
      _
    $region19: #{attention_forward.1} parent=1 // pred_check_branch
      %301 = sbr.rel (0) target = $region21
    $region20: #{attention_forward.1} parent=1 // pred_region
      %s303 = ssub.s32 64, 64
      %304 = vsyncadd [#allocation4], %s303
      %s306 = sshll.u32 [#allocation7], 4
      %s307 = int_to_ptr.vmem [resolvable:$true] %s306
      %309 = dma.vmem_to_hbm [thread:$0]  %s307, 64, %s2, [#allocation4]
    $region21: #{attention_forward.1} parent=1 // pred_fallthru
      _
    // Predicated region
    $region22: #{attention_forward.1} parent=1 // pred_check
      _
    $region23: #{attention_forward.1} parent=1 // pred_check_branch
      %311 = sbr.rel (0) target = $region25
    $region24: #{attention_forward.1} parent=1 // pred_region
      %312 = dma.done [#allocation4], 64
    $region25: #{attention_forward.1} parent=1 // pred_fallthru
      _
    %313 = vsyncpa [#allocation3], 1
    %314 = vsyncpa [#allocation6], 1
    %315 = vsyncpa [#allocation4], 1

</llo_original>
